<compile_context>
chip_gen: v6e
topology: v6e:2x2x1
jax: 0.10.0
libtpu: 0.0.40
codegen_flags: <defaults>
</compile_context>

<pallas_src>
import functools

import jax
import jax.numpy as jnp
from jax import lax
from jax.experimental import pallas as pl
from jax.experimental.pallas import tpu as pltpu

LANES = 128
SUBLANES = 8
CHUNK = SUBLANES * LANES            # elements per (8,128) vreg tile
UNROLL = 8                          # fori_loop unroll factor (vregs per scheduled chunk)
PAD_LOGIT = -1.0e4                  # tanh(0.5*PAD) == -1 -> p == 0, softplus term == 0
TILE_BUDGET_BYTES = 8 * 1024 * 1024 # double-buffered input bytes per grid step


def _partials_kernel(x_ref, t_ref, out_ref, *, tile_n, n_tiles, mask_tail):
    """One (b*c, spatial-tile) grid step.

    x_ref, t_ref : (1, tile_n, 8, 128) blocks of logits / targets (native dtype).
    out_ref      : (1, 32, 128) f32 accumulator, resident across the spatial axis:
                     rows  0: 8 -> sum(sigmoid(x) * t)   (intersect)
                     rows  8:16 -> sum(sigmoid(x))       (sum_pred)
                     rows 16:24 -> sum(t)                (sum_gt)
                     rows 24:32 -> sum(BCE-with-logits)  (bce_sum)
    """
    step = pl.program_id(1)

    @pl.when(step == 0)
    def _():
        out_ref[...] = jnp.zeros_like(out_ref)

    base = step * tile_n

    def body(j, carry):
        acc_it, acc_p, acc_t, acc_b = carry
        x = x_ref[0, j].astype(jnp.float32)     # (8,128)
        t = t_ref[0, j].astype(jnp.float32)
        if mask_tail:
            # Ragged last block: out-of-bounds DMA fill is unspecified, so mask
            # the raw loads (select -> safe even against NaN/Inf garbage).
            valid = (base + j) < n_tiles
            x = jnp.where(valid, x, PAD_LOGIT)
            t = jnp.where(valid, t, 0.0)

        # sigmoid via tanh: single EUP op, exact 0 for the PAD_LOGIT sentinel.
        p = 0.5 * jnp.tanh(0.5 * x) + 0.5
        # Numerically stable BCE-with-logits: max(x,0) - x*t + softplus(-|x|),
        # with softplus(-|x|) = -log(sigmoid(|x|)) = -log(p if x>=0 else 1-p).
        sp = -jnp.log(jnp.where(x >= 0.0, p, 1.0 - p))
        bce = jnp.maximum(x, 0.0) - x * t + sp

        return (acc_it + p * t, acc_p + p, acc_t + t, acc_b + bce)

    zero = jnp.zeros((SUBLANES, LANES), jnp.float32)
    acc_it, acc_p, acc_t, acc_b = lax.fori_loop(
        0, tile_n, body, (zero, zero, zero, zero),
        unroll=min(UNROLL, max(tile_n, 1)))

    out_ref[0, 0 * SUBLANES:1 * SUBLANES, :] += acc_it
    out_ref[0, 1 * SUBLANES:2 * SUBLANES, :] += acc_p
    out_ref[0, 2 * SUBLANES:3 * SUBLANES, :] += acc_t
    out_ref[0, 3 * SUBLANES:4 * SUBLANES, :] += acc_b


def dc_and_bce_loss(net_output, target, *, weight_ce=1.0, weight_dice=1.0,
                    batch_dice=True, smooth=1e-5,
                    tile_budget_bytes=TILE_BUDGET_BYTES):
    """Forward pass of DC_and_BCE_loss (use_ignore_label=False).

    net_output : (B, C, H, W) logits (f32 or bf16 — streamed in native dtype).
    target     : (B, C, H, W) region labels in {0,1}.  For best HBM bandwidth
                 pass bf16 targets; non-float targets are cast to bf16 here.
    """
    B, C, H, W = net_output.shape
    assert target.shape == net_output.shape
    S = H * W
    BC = B * C

    if net_output.dtype not in (jnp.float32, jnp.bfloat16, jnp.float16):
        net_output = net_output.astype(jnp.float32)
    if not jnp.issubdtype(target.dtype, jnp.floating):
        target = target.astype(jnp.bfloat16)

    n = pl.cdiv(S, CHUNK)                       # (8,128) tiles per (b,c) row
    s_pad = n * CHUNK

    x = net_output.reshape(BC, S)
    t = target.reshape(BC, S)
    if s_pad != S:
        # Only when H*W isn't a multiple of 1024 (rare for nnU-Net patch sizes).
        # TODO(synk): this is a full HBM copy; an in-kernel element mask for the
        # sub-1024 tail would avoid it.
        x = jnp.pad(x, ((0, 0), (0, s_pad - S)), constant_values=PAD_LOGIT)
        t = jnp.pad(t, ((0, 0), (0, s_pad - S)), constant_values=0)
    x = x.reshape(BC, n, SUBLANES, LANES)       # free view when no pad
    t = t.reshape(BC, n, SUBLANES, LANES)

    # Tile size from a VMEM budget: 2 inputs x 2 pipeline buffers <= budget.
    bytes_per_tile = CHUNK * (jnp.dtype(x.dtype).itemsize
                              + jnp.dtype(t.dtype).itemsize)
    tile_n = max(1, min(n, tile_budget_bytes // (2 * bytes_per_tile), 1024))
    if tile_n >= UNROLL:
        tile_n = (tile_n // UNROLL) * UNROLL
    steps = pl.cdiv(n, tile_n)
    mask_tail = (n % tile_n) != 0

    kernel = functools.partial(_partials_kernel, tile_n=tile_n, n_tiles=n,
                               mask_tail=mask_tail)

    partials = pl.pallas_call(
        kernel,
        out_shape=jax.ShapeDtypeStruct((BC, 4 * SUBLANES, LANES), jnp.float32),
        grid_spec=pltpu.PrefetchScalarGridSpec(
            num_scalar_prefetch=0,
            grid=(BC, steps),
            in_specs=[
                pl.BlockSpec((1, tile_n, SUBLANES, LANES),
                             lambda g, s: (g, s, 0, 0)),
                pl.BlockSpec((1, tile_n, SUBLANES, LANES),
                             lambda g, s: (g, s, 0, 0)),
            ],
            out_specs=pl.BlockSpec((1, 4 * SUBLANES, LANES),
                                   lambda g, s: (g, 0, 0)),
        ),
        compiler_params=pltpu.CompilerParams(
            dimension_semantics=("parallel", "arbitrary"),
            # Covers double-buffered inputs (<= ~8 MiB) with ample headroom;
            # within scoped VMEM on v5e/v6e (128 MiB) and v7x (64 MiB).
            vmem_limit_bytes=32 * 1024 * 1024,
        ),
    )(x, t)

    # ---- tiny scalar tail in plain JAX ----
    partials = partials.reshape(B, C, 4, SUBLANES, LANES)
    sums = jnp.sum(partials, axis=(-2, -1))                 # (B, C, 4)
    intersect = sums[..., 0]
    sum_pred = sums[..., 1]
    sum_gt = sums[..., 2]
    bce_sum = sums[..., 3]

    # MemoryEfficientSoftDiceLoss (do_bg=True, loss_mask=None)
    if batch_dice:
        intersect = intersect.sum(axis=0)
        sum_pred = sum_pred.sum(axis=0)
        sum_gt = sum_gt.sum(axis=0)
    dc = (2.0 * intersect + smooth) / jnp.maximum(sum_gt + sum_pred + smooth, 1e-8)
    dc_loss = -jnp.mean(dc)

    # BCEWithLogitsLoss (reduction='mean' over all original elements)
    ce_loss = jnp.sum(bce_sum) / (B * C * H * W)

    return weight_ce * ce_loss + weight_dice * dc_loss


def _reference_loss(net_output, target, *, weight_ce=1.0, weight_dice=1.0,
                    batch_dice=True, smooth=1e-5):
    """Pure-JAX mirror of the PyTorch DC_and_BCE_loss forward (sanity check)."""
    net_output = net_output.astype(jnp.float32)
    target = target.astype(jnp.float32)
    p = jax.nn.sigmoid(net_output)
    axes = (2, 3)
    intersect = jnp.sum(p * target, axis=axes)
    sum_pred = jnp.sum(p, axis=axes)
    sum_gt = jnp.sum(target, axis=axes)
    if batch_dice:
        intersect = intersect.sum(axis=0)
        sum_pred = sum_pred.sum(axis=0)
        sum_gt = sum_gt.sum(axis=0)
    dc = (2.0 * intersect + smooth) / jnp.maximum(sum_gt + sum_pred + smooth, 1e-8)
    dc_loss = -jnp.mean(dc)

    z = net_output
    bce = jnp.maximum(z, 0.0) - z * target + jnp.log1p(jnp.exp(-jnp.abs(z)))
    ce_loss = jnp.mean(bce)

    return weight_ce * ce_loss + weight_dice * dc_loss


if __name__ == "__main__":
    key = jax.random.PRNGKey(0)
    k1, k2, k3, k4 = jax.random.split(key, 4)

    # Test 1: the module's nominal small shape (exercises the sub-1024 pad path).
    B, C, H, W = 2, 4, 16, 16
    net_output = jax.random.normal(k1, (B, C, H, W), dtype=jnp.float32)  # logits
    target = (jax.random.uniform(k2, (B, C, H, W)) > 0.5).astype(jnp.float32)

    loss = jax.block_until_ready(dc_and_bce_loss(net_output, target))
    ref = jax.block_until_ready(_reference_loss(net_output, target))
    assert jnp.isfinite(loss), "loss is not finite"
    assert jnp.allclose(loss, ref, rtol=1e-5, atol=1e-5), (loss, ref)

    # Test 2: multi-step accumulation + ragged (masked) last block, no padding
    # (H*W multiple of 1024; tiny tile budget forces tile_n=2 over n=3 tiles).
    B2, C2, H2, W2 = 1, 2, 48, 64
    x2 = jax.random.normal(k3, (B2, C2, H2, W2), dtype=jnp.float32)
    t2 = (jax.random.uniform(k4, (B2, C2, H2, W2)) > 0.5).astype(jnp.float32)

    loss2 = jax.block_until_ready(
        dc_and_bce_loss(x2, t2, tile_budget_bytes=2 * 2 * CHUNK * 8))
    ref2 = jax.block_until_ready(_reference_loss(x2, t2))
    assert jnp.isfinite(loss2), "loss2 is not finite"
    assert jnp.allclose(loss2, ref2, rtol=1e-5, atol=1e-5), (loss2, ref2)

    print("KERNEL_OK")
</pallas_src>

<mosaic_0001>
module attributes {stable_mosaic.version = 11 : i64} {
  func.func @_partials_kernel(%arg0: i32, %arg1: i32, %arg2: memref<1x1x8x128xf32, #tpu.memory_space<vmem>>, %arg3: memref<1x1x8x128xf32, #tpu.memory_space<vmem>>, %arg4: memref<1x32x128xf32, #tpu.memory_space<vmem>>) attributes {dimension_semantics = [#tpu.dimension_semantics<parallel>, #tpu.dimension_semantics<arbitrary>], iteration_bounds = array<i64: 8, 1>, scalar_prefetch = 0 : i64, scratch_operands = 0 : i64, tpu.core_type = #tpu.core_type<tc>, window_params = [{transform_indices = @transform_0, window_bounds = array<i64: 1, 1, 8, 128>}, {transform_indices = @transform_1, window_bounds = array<i64: 1, 1, 8, 128>}, {transform_indices = @transform_2, window_bounds = array<i64: 1, 32, 128>}]} {
    %c0_i32 = arith.constant 0 : i32
    %0 = arith.cmpi eq, %arg1, %c0_i32 : i32
    %1 = arith.extui %0 : i1 to i32
    %c0_i32_0 = arith.constant 0 : i32
    %2 = arith.cmpi ne, %1, %c0_i32_0 : i32
    scf.if %2 {
      %cst_35 = arith.constant 0.000000e+00 : f32
      %59 = vector.broadcast %cst_35 : f32 to vector<1x32x128xf32>
      %c0_36 = arith.constant 0 : index
      %c0_37 = arith.constant 0 : index
      %c0_38 = arith.constant 0 : index
      %60 = vector.load %arg4[%c0_36, %c0_37, %c0_38] : memref<1x32x128xf32, #tpu.memory_space<vmem>>, vector<1x32x128xf32>
      tpu.vector_store %arg4[%c0_36, %c0_37, %c0_38], %59 {strides = array<i32>} : memref<1x32x128xf32, #tpu.memory_space<vmem>>, vector<1x32x128xf32>,
    } else {
    }
    %cst = arith.constant 0.000000e+00 : f32
    %3 = vector.broadcast %cst : f32 to vector<8x128xf32>
    %c0_i32_1 = arith.constant 0 : i32
    %c0 = arith.constant 0 : index
    %4 = arith.index_cast %c0_i32_1 : i32 to index
    %c0_2 = arith.constant 0 : index
    %c0_3 = arith.constant 0 : index
    %5 = vector.load %arg2[%c0, %4, %c0_2, %c0_3] : memref<1x1x8x128xf32, #tpu.memory_space<vmem>>, vector<1x1x8x128xf32>
    %6 = vector.shape_cast %5 : vector<1x1x8x128xf32> to vector<8x128xf32>
    %c0_4 = arith.constant 0 : index
    %7 = arith.index_cast %c0_i32_1 : i32 to index
    %c0_5 = arith.constant 0 : index
    %c0_6 = arith.constant 0 : index
    %8 = vector.load %arg3[%c0_4, %7, %c0_5, %c0_6] : memref<1x1x8x128xf32, #tpu.memory_space<vmem>>, vector<1x1x8x128xf32>
    %9 = vector.shape_cast %8 : vector<1x1x8x128xf32> to vector<8x128xf32>
    %cst_7 = arith.constant 5.000000e-01 : f32
    %10 = vector.broadcast %cst_7 : f32 to vector<8x128xf32>
    %11 = arith.mulf %10, %6 : vector<8x128xf32>
    %12 = math.tanh %11 : vector<8x128xf32>
    %cst_8 = arith.constant 5.000000e-01 : f32
    %13 = vector.broadcast %cst_8 : f32 to vector<8x128xf32>
    %14 = arith.mulf %13, %12 : vector<8x128xf32>
    %cst_9 = arith.constant 5.000000e-01 : f32
    %15 = vector.broadcast %cst_9 : f32 to vector<8x128xf32>
    %16 = arith.addf %14, %15 : vector<8x128xf32>
    %cst_10 = arith.constant 0.000000e+00 : f32
    %17 = vector.broadcast %cst_10 : f32 to vector<8x128xf32>
    %18 = arith.cmpf oge, %6, %17 : vector<8x128xf32>
    %cst_11 = arith.constant 1.000000e+00 : f32
    %19 = vector.broadcast %cst_11 : f32 to vector<8x128xf32>
    %20 = arith.subf %19, %16 : vector<8x128xf32>
    %21 = arith.select %18, %16, %20 : vector<8x128xi1>, vector<8x128xf32>
    %22 = math.log %21 : vector<8x128xf32>
    %cst_12 = arith.constant 0.000000e+00 : f32
    %23 = vector.broadcast %cst_12 : f32 to vector<8x128xf32>
    %24 = arith.subf %23, %22 : vector<8x128xf32>
    %cst_13 = arith.constant 0.000000e+00 : f32
    %25 = vector.broadcast %cst_13 : f32 to vector<8x128xf32>
    %26 = arith.maximumf %6, %25 : vector<8x128xf32>
    %27 = arith.mulf %6, %9 : vector<8x128xf32>
    %28 = arith.subf %26, %27 : vector<8x128xf32>
    %29 = arith.addf %28, %24 : vector<8x128xf32>
    %30 = arith.mulf %16, %9 : vector<8x128xf32>
    %31 = arith.addf %3, %30 : vector<8x128xf32>
    %32 = arith.addf %3, %16 : vector<8x128xf32>
    %33 = arith.addf %3, %9 : vector<8x128xf32>
    %34 = arith.addf %3, %29 : vector<8x128xf32>
    %c1_i32 = arith.constant 1 : i32
    %c0_14 = arith.constant 0 : index
    %c0_15 = arith.constant 0 : index
    %c0_16 = arith.constant 0 : index
    %35 = vector.load %arg4[%c0_14, %c0_15, %c0_16] : memref<1x32x128xf32, #tpu.memory_space<vmem>>, vector<1x8x128xf32>
    %36 = vector.shape_cast %35 : vector<1x8x128xf32> to vector<8x128xf32>
    %37 = arith.addf %36, %31 : vector<8x128xf32>
    %c0_17 = arith.constant 0 : index
    %c0_18 = arith.constant 0 : index
    %c0_19 = arith.constant 0 : index
    %38 = vector.load %arg4[%c0_17, %c0_18, %c0_19] : memref<1x32x128xf32, #tpu.memory_space<vmem>>, vector<1x8x128xf32>
    %39 = vector.shape_cast %38 : vector<1x8x128xf32> to vector<8x128xf32>
    %40 = vector.shape_cast %37 : vector<8x128xf32> to vector<1x8x128xf32>
    tpu.vector_store %arg4[%c0_17, %c0_18, %c0_19], %40 {strides = array<i32>} : memref<1x32x128xf32, #tpu.memory_space<vmem>>, vector<1x8x128xf32>,
    %c0_20 = arith.constant 0 : index
    %c8 = arith.constant 8 : index
    %c0_21 = arith.constant 0 : index
    %41 = vector.load %arg4[%c0_20, %c8, %c0_21] : memref<1x32x128xf32, #tpu.memory_space<vmem>>, vector<1x8x128xf32>
    %42 = vector.shape_cast %41 : vector<1x8x128xf32> to vector<8x128xf32>
    %43 = arith.addf %42, %32 : vector<8x128xf32>
    %c0_22 = arith.constant 0 : index
    %c8_23 = arith.constant 8 : index
    %c0_24 = arith.constant 0 : index
    %44 = vector.load %arg4[%c0_22, %c8_23, %c0_24] : memref<1x32x128xf32, #tpu.memory_space<vmem>>, vector<1x8x128xf32>
    %45 = vector.shape_cast %44 : vector<1x8x128xf32> to vector<8x128xf32>
    %46 = vector.shape_cast %43 : vector<8x128xf32> to vector<1x8x128xf32>
    tpu.vector_store %arg4[%c0_22, %c8_23, %c0_24], %46 {strides = array<i32>} : memref<1x32x128xf32, #tpu.memory_space<vmem>>, vector<1x8x128xf32>,
    %c0_25 = arith.constant 0 : index
    %c16 = arith.constant 16 : index
    %c0_26 = arith.constant 0 : index
    %47 = vector.load %arg4[%c0_25, %c16, %c0_26] : memref<1x32x128xf32, #tpu.memory_space<vmem>>, vector<1x8x128xf32>
    %48 = vector.shape_cast %47 : vector<1x8x128xf32> to vector<8x128xf32>
    %49 = arith.addf %48, %33 : vector<8x128xf32>
    %c0_27 = arith.constant 0 : index
    %c16_28 = arith.constant 16 : index
    %c0_29 = arith.constant 0 : index
    %50 = vector.load %arg4[%c0_27, %c16_28, %c0_29] : memref<1x32x128xf32, #tpu.memory_space<vmem>>, vector<1x8x128xf32>
    %51 = vector.shape_cast %50 : vector<1x8x128xf32> to vector<8x128xf32>
    %52 = vector.shape_cast %49 : vector<8x128xf32> to vector<1x8x128xf32>
    tpu.vector_store %arg4[%c0_27, %c16_28, %c0_29], %52 {strides = array<i32>} : memref<1x32x128xf32, #tpu.memory_space<vmem>>, vector<1x8x128xf32>,
    %c0_30 = arith.constant 0 : index
    %c24 = arith.constant 24 : index
    %c0_31 = arith.constant 0 : index
    %53 = vector.load %arg4[%c0_30, %c24, %c0_31] : memref<1x32x128xf32, #tpu.memory_space<vmem>>, vector<1x8x128xf32>
    %54 = vector.shape_cast %53 : vector<1x8x128xf32> to vector<8x128xf32>
    %55 = arith.addf %54, %34 : vector<8x128xf32>
    %c0_32 = arith.constant 0 : index
    %c24_33 = arith.constant 24 : index
    %c0_34 = arith.constant 0 : index
    %56 = vector.load %arg4[%c0_32, %c24_33, %c0_34] : memref<1x32x128xf32, #tpu.memory_space<vmem>>, vector<1x8x128xf32>
    %57 = vector.shape_cast %56 : vector<1x8x128xf32> to vector<8x128xf32>
    %58 = vector.shape_cast %55 : vector<8x128xf32> to vector<1x8x128xf32>
    tpu.vector_store %arg4[%c0_32, %c24_33, %c0_34], %58 {strides = array<i32>} : memref<1x32x128xf32, #tpu.memory_space<vmem>>, vector<1x8x128xf32>,
    return
  }
  func.func @transform_0(%arg0: i32, %arg1: i32) -> (i32, i32, i32, i32) {
    %c0_i32 = arith.constant 0 : i32
    %c0_i32_0 = arith.constant 0 : i32
    %c0_i32_1 = arith.constant 0 : i32
    return %arg0, %arg1, %c0_i32, %c0_i32_0 : i32, i32, i32, i32
  }
  func.func @transform_1(%arg0: i32, %arg1: i32) -> (i32, i32, i32, i32) {
    %c0_i32 = arith.constant 0 : i32
    %c0_i32_0 = arith.constant 0 : i32
    %c0_i32_1 = arith.constant 0 : i32
    return %arg0, %arg1, %c0_i32, %c0_i32_0 : i32, i32, i32, i32
  }
  func.func @transform_2(%arg0: i32, %arg1: i32) -> (i32, i32, i32) {
    %c0_i32 = arith.constant 0 : i32
    %c0_i32_0 = arith.constant 0 : i32
    %c0_i32_1 = arith.constant 0 : i32
    return %arg0, %c0_i32, %c0_i32_0 : i32, i32, i32
  }
}

</mosaic_0001>

<llo_original>
// kernel: tpu_custom_call.1
$region0: #{tpu_custom_call.1}
  #allocation0 [shape = 'u32[]', space=smem, size = 0x4, offset = 0x4, fixed_abs, tag = 'smem constant byte address 0x4 - core index']
  #allocation1 [shape = 'u32[144,128]{1,0:T(1,128)}', space=vmem, size = 0x12000, scoped, tag = 'internal scratch']
  %s0 = inlined_call_operand.hbm [shape: f32[8,1,8,128], index: 0, kind: input, shape index: {}]
  %s1 = inlined_call_operand.hbm [shape: f32[8,1,8,128], index: 1, kind: input, shape index: {}]
  %s2 = inlined_call_operand.hbm [shape: f32[8,32,128], index: 2, kind: output, shape index: {}]
  %s3 = sld [smem:[#allocation0]]
  $region53: #{tpu_custom_call.1} parent=0
    _
  %s5 = ssub.s32 1, %s3
  %s6 = scalar_select 0, %s5, %s3
  $region1: #{tpu_custom_call.1} parent=0
    #allocation2 [shape = 'u8[8192]{0}', space=vmem, size = 0x2000, scoped, tag = 'input window, operand 0']
    #allocation3 [shape = 's32[2]{0}', space=sflag, size = 0x8, scoped, tag = 'scoped memory for tpu_custom_call.1']
    #allocation4 [shape = 's32[2]{0}', space=sflag, size = 0x8, scoped, tag = 'scoped memory for tpu_custom_call.1']
    #allocation5 [shape = 'u8[8192]{0}', space=vmem, size = 0x2000, scoped, tag = 'input window, operand 1']
    #allocation6 [shape = 's32[2]{0}', space=sflag, size = 0x8, scoped, tag = 'scoped memory for tpu_custom_call.1']
    #allocation7 [shape = 'u8[32768]{0}', space=vmem, size = 0x8000, scoped, tag = 'output window, operand 0']
    %7 = vsyncpa [#allocation3], 0
    %s8 = scalar_lea.sflag [#allocation3], 1
    %9 = vsyncpa %s8, 0
    %10 = vsyncpa [#allocation6], 0
    %s11 = scalar_lea.sflag [#allocation6], 1
    %12 = vsyncpa %s11, 0
    %13 = vsyncpa [#allocation4], 0
    %s14 = scalar_lea.sflag [#allocation4], 1
    %15 = vsyncpa %s14, 0
    loop: start=0, step=1, limit=10
    $region2: #{tpu_custom_call.1} parent=1 // loop_pre_header
      _
    $region3: #{tpu_custom_call.1} parent=1 // loop_header
      %s17 = sphi 0, %s21
      %p18 = scmp.ge.s32.totalorder %s17, 10
      %s24 = sphi 0, %s36
      %s25 = sphi 0, %s32
      %s26 = sphi 0, %s24
      %s27 = sphi 0, %s25
      %s28 = sphi 0, %s26
      %s29 = sphi 0, %s27
      %s41 = sphi 0, %s43
      %s44 = sphi 0, %s41
      %s45 = sphi 0, %s44
      %s61 = sphi 0, %s45
      %s69 = sphi 0, %s71
      %s72 = sphi 0, %s69
      %s73 = sphi 0, %s72
      %s89 = sphi 0, %s73
      %s95 = sphi 0, %s97
      %s98 = sphi 0, %s95
      %s99 = sphi 0, %s98
      %s115 = sphi 0, %s99
    $region4: #{tpu_custom_call.1} parent=1 // loop_header_branch
      %20 = sbr.rel (%p18) target = $region8
    $region5: #{tpu_custom_call.1} parent=1 // loop_body
      %s22 = ssub.s32 %s17, 1
      %s23 = ssub.s32 %s17, 2
      %s30 = sadd.s32 1, %s25
      %p31 = scmp.ge.s32.totalorder %s30, 1
      %s32 = scalar_select %p31, 0, %s30
      %s33 = sadd.s32 1, %s24
      %s34 = scalar_select %p31, %s33, %s24
      %p35 = scmp.ge.s32.totalorder %s34, 8
      %s36 = scalar_select %p35, 0, %s34
      %s37 = ssub.s32 %s24, %s36
      %s38 = ssub.s32 %s25, %s32
      %s39 = sor.u32 %s37, %s38
      %p40 = scmp.eq.s32.totalorder %s39, 0
      %s42 = sadd.s32 %s41, 1
      %s43 = scalar_select %p40, %s41, %s42
      %p46 = pneg %p40
      %p47 = scmp.eq.s32.totalorder %s17, 7
      %p48 = por %p46, %p47
      %p49 = scmp.ne.s32.totalorder %s41, %s44
      %p50 = scmp.eq.s32.totalorder %s17, 0
      %p51 = por %p49, %p50
      %p52 = scmp.ne.s32.totalorder %s41, %s44
      %p53 = scmp.eq.s32.totalorder %s22, 7
      %p54 = por %p52, %p53
      %p55 = scmp.ne.s32.totalorder %s44, %s45
      %p56 = scmp.eq.s32.totalorder %s22, 0
      %p57 = por %p55, %p56
      %p58 = scmp.ne.s32.totalorder %s44, %s45
      %p59 = scmp.eq.s32.totalorder %s23, 7
      %p60 = por %p58, %p59
      %p62 = scmp.ne.s32.totalorder %s45, %s61
      %p63 = scmp.eq.s32.totalorder %s23, 0
      %p64 = por %p62, %p63
      %s65 = ssub.s32 %s24, %s36
      %s66 = ssub.s32 %s25, %s32
      %s67 = sor.u32 %s65, %s66
      %p68 = scmp.eq.s32.totalorder %s67, 0
      %s70 = sadd.s32 %s69, 1
      %s71 = scalar_select %p68, %s69, %s70
      %p74 = pneg %p68
      %p75 = scmp.eq.s32.totalorder %s17, 7
      %p76 = por %p74, %p75
      %p77 = scmp.ne.s32.totalorder %s69, %s72
      %p78 = scmp.eq.s32.totalorder %s17, 0
      %p79 = por %p77, %p78
      %p80 = scmp.ne.s32.totalorder %s69, %s72
      %p81 = scmp.eq.s32.totalorder %s22, 7
      %p82 = por %p80, %p81
      %p83 = scmp.ne.s32.totalorder %s72, %s73
      %p84 = scmp.eq.s32.totalorder %s22, 0
      %p85 = por %p83, %p84
      %p86 = scmp.ne.s32.totalorder %s72, %s73
      %p87 = scmp.eq.s32.totalorder %s23, 7
      %p88 = por %p86, %p87
      %p90 = scmp.ne.s32.totalorder %s73, %s89
      %p91 = scmp.eq.s32.totalorder %s23, 0
      %p92 = por %p90, %p91
      %s93 = ssub.s32 %s24, %s36
      %p94 = scmp.eq.s32.totalorder %s93, 0
      %s96 = sadd.s32 %s95, 1
      %s97 = scalar_select %p94, %s95, %s96
      %p100 = pneg %p94
      %p101 = scmp.eq.s32.totalorder %s17, 7
      %p102 = por %p100, %p101
      %p103 = scmp.ne.s32.totalorder %s95, %s98
      %p104 = scmp.eq.s32.totalorder %s17, 0
      %p105 = por %p103, %p104
      %p106 = scmp.ne.s32.totalorder %s95, %s98
      %p107 = scmp.eq.s32.totalorder %s22, 7
      %p108 = por %p106, %p107
      %p109 = scmp.ne.s32.totalorder %s98, %s99
      %p110 = scmp.eq.s32.totalorder %s22, 0
      %p111 = por %p109, %p110
      %p112 = scmp.ne.s32.totalorder %s98, %s99
      %p113 = scmp.eq.s32.totalorder %s23, 7
      %p114 = por %p112, %p113
      %p116 = scmp.ne.s32.totalorder %s99, %s115
      %p117 = scmp.eq.s32.totalorder %s23, 0
      %p118 = por %p116, %p117
      %p119 = scmp.le.s32.totalorder 1, %s17
      %p120 = scmp.lt.s32.totalorder %s17, 9
      %p121 = pnand %p119, %p120
      %p122 = pneg %p121
      // Predicated region
      $region9: #{tpu_custom_call.1} parent=5 // pred_check
        _
      $region10: #{tpu_custom_call.1} parent=5 // pred_check_branch
        %124 = sbr.rel (%p121) target = $region12
      $region11: #{tpu_custom_call.1} parent=5 // pred_region
        %s125 = ssub.s32 %s17, 1
      $region12: #{tpu_custom_call.1} parent=5 // pred_fallthru
        _
      %p126 = scmp.lt.s32.totalorder %s17, 8
      // Predicated region
      $region13: #{tpu_custom_call.1} parent=5 // pred_check
        %p127 = pneg %p126
      $region14: #{tpu_custom_call.1} parent=5 // pred_check_branch
        %129 = sbr.rel (%p127) target = $region16
      $region15: #{tpu_custom_call.1} parent=5 // pred_region
        // Predicated region
        $region17: #{tpu_custom_call.1} parent=15 // pred_check
          %p130 = pneg %p51
        $region18: #{tpu_custom_call.1} parent=15 // pred_check_branch
          %132 = sbr.rel (%p130) target = $region20
        $region19: #{tpu_custom_call.1} parent=15 // pred_region
          %s133 = sand.u32 %s41, 1
          %s134 = scalar_lea.sflag [#allocation3], %s133
          %s135 = sand.u32 %s41, 1
          %s136 = smul.addr %s135, 8
          %s137 = scalar_lea.vmem [#allocation2], %s136
          %s139 = ssub.s32 128, 128
          %140 = vsyncadd %s134, %s139
          %s141 = sadd.s32 %s25, %s24
          %s142 = smul.addr %s141, 128
          %s143 = scalar_lea.hbm %s0, %s142
          %s145 = sshll.u32 %s137, 4
          %s146 = int_to_ptr.vmem [resolvable:$true] %s145
          %148 = dma.hbm_to_vmem [thread:$0]  %s143, 128, %s146, %s134
        $region20: #{tpu_custom_call.1} parent=15 // pred_fallthru
          _
        // Predicated region
        $region21: #{tpu_custom_call.1} parent=15 // pred_check
          %p149 = pneg %p79
        $region22: #{tpu_custom_call.1} parent=15 // pred_check_branch
          %151 = sbr.rel (%p149) target = $region24
        $region23: #{tpu_custom_call.1} parent=15 // pred_region
          %s152 = sand.u32 %s69, 1
          %s153 = scalar_lea.sflag [#allocation6], %s152
          %s154 = sand.u32 %s69, 1
          %s155 = smul.addr %s154, 8
          %s156 = scalar_lea.vmem [#allocation5], %s155
          %s158 = ssub.s32 128, 128
          %159 = vsyncadd %s153, %s158
          %s160 = sadd.s32 %s25, %s24
          %s161 = smul.addr %s160, 128
          %s162 = scalar_lea.hbm %s1, %s161
          %s164 = sshll.u32 %s156, 4
          %s165 = int_to_ptr.vmem [resolvable:$true] %s164
          %167 = dma.hbm_to_vmem [thread:$0]  %s162, 128, %s165, %s153
        $region24: #{tpu_custom_call.1} parent=15 // pred_fallthru
          _
      $region16: #{tpu_custom_call.1} parent=5 // pred_fallthru
        _
      %p168 = scmp.le.s32.totalorder 1, %s17
      %p169 = scmp.lt.s32.totalorder %s17, 9
      %p170 = pnand %p168, %p169
      %p171 = pneg %p170
      // Predicated region
      $region25: #{tpu_custom_call.1} parent=5 // pred_check
        _
      $region26: #{tpu_custom_call.1} parent=5 // pred_check_branch
        %173 = sbr.rel (%p170) target = $region28
      $region27: #{tpu_custom_call.1} parent=5 // pred_region
        %s174 = ssub.s32 %s17, 1
        %s175 = sand.u32 %s44, 1
        %s176 = scalar_lea.sflag [#allocation3], %s175
        %s177 = sand.u32 %s44, 1
        %s178 = smul.addr %s177, 8
        %s179 = scalar_lea.vmem [#allocation2], %s178
        // Predicated region
        $region29: #{tpu_custom_call.1} parent=27 // pred_check
          %p180 = pneg %p57
        $region30: #{tpu_custom_call.1} parent=27 // pred_check_branch
          %182 = sbr.rel (%p180) target = $region32
        $region31: #{tpu_custom_call.1} parent=27 // pred_region
          %183 = dma.done %s176, 128
        $region32: #{tpu_custom_call.1} parent=27 // pred_fallthru
          _
        %s184 = sand.u32 %s72, 1
        %s185 = scalar_lea.sflag [#allocation6], %s184
        %s186 = sand.u32 %s72, 1
        %s187 = smul.addr %s186, 8
        %s188 = scalar_lea.vmem [#allocation5], %s187
        // Predicated region
        $region33: #{tpu_custom_call.1} parent=27 // pred_check
          %p189 = pneg %p85
        $region34: #{tpu_custom_call.1} parent=27 // pred_check_branch
          %191 = sbr.rel (%p189) target = $region36
        $region35: #{tpu_custom_call.1} parent=27 // pred_region
          %192 = dma.done %s185, 128
        $region36: #{tpu_custom_call.1} parent=27 // pred_fallthru
          _
        %s193 = sand.u32 %s44, 1
        %s194 = scalar_lea.sflag [#allocation3], %s193
        %s195 = sand.u32 %s44, 1
        %s196 = smul.addr %s195, 8
        %s197 = scalar_lea.vmem [#allocation2], %s196
        %p198 = pneg %p57
        %p199 = pneg %p54
        %s200 = sand.u32 %s72, 1
        %s201 = scalar_lea.sflag [#allocation6], %s200
        %s202 = sand.u32 %s72, 1
        %s203 = smul.addr %s202, 8
        %s204 = scalar_lea.vmem [#allocation5], %s203
        %p205 = pneg %p85
        %p206 = pneg %p82
        %p207 = pneg %p111
        %p208 = pneg %p108
        %s209 = sand.u32 %s98, 1
        %s210 = scalar_lea.sflag [#allocation4], %s209
        %s211 = sand.u32 %s98, 1
        %s212 = smul.addr %s211, 32
        %s213 = scalar_lea.vmem [#allocation7], %s212
        %p214 = scmp.eq.s32.totalorder %s27, 0
        // Predicated region
        $region37: #{tpu_custom_call.1} parent=27 // pred_check
          %p215 = pneg %p214
        $region38: #{tpu_custom_call.1} parent=27 // pred_check_branch
          %217 = sbr.rel (%p215) target = $region40
        $region39: #{tpu_custom_call.1} parent=27 // pred_region
          %218 = vst [vmem:[%s213] sm:$0xff] 0.0
          %219 = vst [vmem:[%s213 + $0x8] sm:$0xff] 0.0
          %220 = vst [vmem:[%s213 + $0x10] sm:$0xff] 0.0
          %221 = vst [vmem:[%s213 + $0x18] sm:$0xff] 0.0
        $region40: #{tpu_custom_call.1} parent=27 // pred_fallthru
          _
        %v222 = vld [vmem:[%s179] sm:$0xff]
        %v223 = vld [vmem:[%s188] sm:$0xff]
        %v224 = vmul.f32 %v222, 0.5
        %v225 = vtanh.pop %v224
        %v226 = vmul.f32 %v225, 0.5
        %v227 = vadd.f32 %v226, 0.5
        %vm228 = vcmp.ge.f32.partialorder %v222, 0.0
        %v229 = vsub.f32 1.0, %v227
        %v230 = vsel %vm228, %v227, %v229
        %v231 = vlog2.pop %v230
        %v232 = vmul.f32 %v231, 0.6931472
        %v233 = vsub.f32 0.0, %v232
        %v234 = vmax.f32 %v222, 0.0
        %v235 = vmul.f32 %v222, %v223
        %v236 = vsub.f32 %v234, %v235
        %v237 = vadd.f32 %v236, %v233
        %v238 = vmul.f32 %v227, %v223
        %v239 = vadd.f32 %v238, 0.0
        %v240 = vadd.f32 %v227, 0.0
        %v241 = vadd.f32 %v223, 0.0
        %v242 = vadd.f32 %v237, 0.0
        %v243 = vld [vmem:[%s213] sm:$0xff]
        %v244 = vadd.f32 %v243, %v239
        %245 = vst [vmem:[%s213] sm:$0xff] %v244
        %v246 = vld [vmem:[%s213 + $0x8] sm:$0xff]
        %v247 = vadd.f32 %v246, %v240
        %248 = vst [vmem:[%s213 + $0x8] sm:$0xff] %v247
        %v249 = vld [vmem:[%s213 + $0x10] sm:$0xff]
        %v250 = vadd.f32 %v249, %v241
        %251 = vst [vmem:[%s213 + $0x10] sm:$0xff] %v250
        %v252 = vld [vmem:[%s213 + $0x18] sm:$0xff]
        %v253 = vadd.f32 %v252, %v242
        %254 = vst [vmem:[%s213 + $0x18] sm:$0xff] %v253
        %s255 = sand.u32 %s98, 1
        %s256 = scalar_lea.sflag [#allocation4], %s255
        %s257 = sand.u32 %s98, 1
        %s258 = smul.addr %s257, 32
        %s259 = scalar_lea.vmem [#allocation7], %s258
        // Predicated region
        $region41: #{tpu_custom_call.1} parent=27 // pred_check
          %p260 = pneg %p108
        $region42: #{tpu_custom_call.1} parent=27 // pred_check_branch
          %262 = sbr.rel (%p260) target = $region44
        $region43: #{tpu_custom_call.1} parent=27 // pred_region
          %s264 = ssub.s32 512, 512
          %265 = vsyncadd %s256, %s264
          %s266 = smul.addr %s26, 4
          %s267 = smul.addr %s266, 128
          %s268 = scalar_lea.hbm %s2, %s267
          %s269 = sshll.u32 %s259, 4
          %s270 = int_to_ptr.vmem [resolvable:$true] %s269
          %275 = dma.vmem_to_hbm [thread:$0]  %s270, 512, %s268, %s256, 128, 128, 8
        $region44: #{tpu_custom_call.1} parent=27 // pred_fallthru
          _
      $region28: #{tpu_custom_call.1} parent=5 // pred_fallthru
        _
      %p276 = scmp.le.s32.totalorder 2, %s17
      // Predicated region
      $region45: #{tpu_custom_call.1} parent=5 // pred_check
        %p277 = pneg %p276
      $region46: #{tpu_custom_call.1} parent=5 // pred_check_branch
        %279 = sbr.rel (%p277) target = $region48
      $region47: #{tpu_custom_call.1} parent=5 // pred_region
        %s280 = ssub.s32 %s17, 2
        // Predicated region
        $region49: #{tpu_custom_call.1} parent=47 // pred_check
          %p281 = pneg %p114
        $region50: #{tpu_custom_call.1} parent=47 // pred_check_branch
          %283 = sbr.rel (%p281) target = $region52
        $region51: #{tpu_custom_call.1} parent=47 // pred_region
          %s284 = sand.u32 %s99, 1
          %s285 = scalar_lea.sflag [#allocation4], %s284
          %s286 = sand.u32 %s99, 1
          %s287 = smul.addr %s286, 32
          %s288 = scalar_lea.vmem [#allocation7], %s287
          %289 = dma.done %s285, 512
        $region52: #{tpu_custom_call.1} parent=47 // pred_fallthru
          _
      $region48: #{tpu_custom_call.1} parent=5 // pred_fallthru
        _
    $region6: #{tpu_custom_call.1} parent=1 // loop_footer
      %s21 = sadd.s32 1, %s17
    $region7: #{tpu_custom_call.1} parent=1 // loop_footer_branch
      %16 = sbr.rel target = $region3
    $region8: #{tpu_custom_call.1} parent=1 // loop_exit
      _
    %290 = vsyncpa [#allocation3], 1
    %s291 = scalar_lea.sflag [#allocation3], 1
    %292 = vsyncpa %s291, 1
    %293 = vsyncpa [#allocation6], 1
    %s294 = scalar_lea.sflag [#allocation6], 1
    %295 = vsyncpa %s294, 1
    %296 = vsyncpa [#allocation4], 1
    %s297 = scalar_lea.sflag [#allocation4], 1
    %298 = vsyncpa %s297, 1

</llo_original>
